<compile_context>
chip_gen: v7x
topology: tpu7x:2x2x1
jax: 0.10.0
libtpu: 0.0.40
codegen_flags: <defaults>
</compile_context>

<pallas_src>
import jax
import jax.numpy as jnp
from jax.experimental import pallas as pl
from jax.experimental.pallas import tpu as pltpu


def sum_diff_kernel(in0_ref, in1_ref, sum_ref, diff_ref):
    a = in0_ref[...]          # (TILE_ROWS, 128) lane-dense tile
    b = in1_ref[...]
    sum_ref[...] = a + b      # SumModule:  INPUT0 + INPUT1
    diff_ref[...] = a - b     # DiffModule: INPUT0 - INPUT1


def _sublane_multiple(dtype):
    """Minimum sublane multiple so a (rows, 128) block tiles vregs cleanly."""
    itemsize = jnp.dtype(dtype).itemsize
    return {4: 8, 2: 16, 1: 32}.get(itemsize, 8)


def test_model(input0, input1):
    """Pallas equivalent of TestModel.forward -> (INPUT0+INPUT1, INPUT0-INPUT1)."""
    assert input0.shape == input1.shape and input0.dtype == input1.dtype
    orig_shape = input0.shape
    dtype = input0.dtype

    n = input0.size
    lanes = 128
    sub = _sublane_multiple(dtype)

    # ---- wrapper-side layout plumbing: pad to a lane/sublane-dense 2-D view.
    rows = pl.cdiv(n, lanes)
    rows = pl.cdiv(rows, sub) * sub                      # sublane-align
    if rows >= 1024:
        tile_rows = 1024
        rows = pl.cdiv(rows, tile_rows) * tile_rows      # tile-align
    else:
        tile_rows = rows
    padded_n = rows * lanes

    x0 = jnp.ravel(input0)
    x1 = jnp.ravel(input1)
    if padded_n != n:
        pad = padded_n - n
        x0 = jnp.pad(x0, (0, pad))
        x1 = jnp.pad(x1, (0, pad))
    x0 = x0.reshape(rows, lanes)
    x1 = x1.reshape(rows, lanes)

    grid = (rows // tile_rows,)
    block = pl.BlockSpec((tile_rows, lanes), lambda i: (i, 0))

    out_sum, out_diff = pl.pallas_call(
        sum_diff_kernel,
        grid=grid,
        in_specs=[block, block],
        out_specs=(block, block),
        out_shape=(
            jax.ShapeDtypeStruct((rows, lanes), dtype),
            jax.ShapeDtypeStruct((rows, lanes), dtype),
        ),
        compiler_params=pltpu.CompilerParams(
            dimension_semantics=("parallel",)
        ),
        cost_estimate=pl.CostEstimate(
            flops=2 * n,
            bytes_accessed=4 * n * jnp.dtype(dtype).itemsize,
            transcendentals=0,
        ),
    )(x0, x1)

    out_sum = out_sum.reshape(-1)[:n].reshape(orig_shape)
    out_diff = out_diff.reshape(-1)[:n].reshape(orig_shape)
    return out_sum, out_diff


if __name__ == "__main__":
    key = jax.random.PRNGKey(0)
    k0, k1 = jax.random.split(key)
    # SMALL shapes consistent with the module (pure elementwise forward).
    x0 = jax.random.normal(k0, (2, 4, 16, 16), dtype=jnp.float32)
    x1 = jax.random.normal(k1, (2, 4, 16, 16), dtype=jnp.float32)

    op0, op1 = jax.jit(test_model)(x0, x1)
    jax.block_until_ready((op0, op1))

    # Correctness check against plain-JAX reference.
    assert op0.shape == x0.shape and op1.shape == x0.shape
    assert jnp.allclose(op0, x0 + x1), "sum mismatch"
    assert jnp.allclose(op1, x0 - x1), "diff mismatch"
    print("KERNEL_OK")
</pallas_src>

<mosaic_0001>
module attributes {stable_mosaic.version = 11 : i64} {
  func.func @sum_diff_kernel(%arg0: i32, %arg1: memref<16x128xf32, #tpu.memory_space<vmem>>, %arg2: memref<16x128xf32, #tpu.memory_space<vmem>>, %arg3: memref<16x128xf32, #tpu.memory_space<vmem>>, %arg4: memref<16x128xf32, #tpu.memory_space<vmem>>) attributes {dimension_semantics = [#tpu.dimension_semantics<parallel>], iteration_bounds = array<i64: 1>, scalar_prefetch = 0 : i64, scratch_operands = 0 : i64, tpu.core_type = #tpu.core_type<tc>, window_params = [{transform_indices = @transform_0, window_bounds = array<i64: 16, 128>}, {transform_indices = @transform_1, window_bounds = array<i64: 16, 128>}, {transform_indices = @transform_2, window_bounds = array<i64: 16, 128>}, {transform_indices = @transform_3, window_bounds = array<i64: 16, 128>}]} {
    %c0 = arith.constant 0 : index
    %c0_0 = arith.constant 0 : index
    %0 = vector.load %arg1[%c0, %c0_0] : memref<16x128xf32, #tpu.memory_space<vmem>>, vector<16x128xf32>
    %c0_1 = arith.constant 0 : index
    %c0_2 = arith.constant 0 : index
    %1 = vector.load %arg2[%c0_1, %c0_2] : memref<16x128xf32, #tpu.memory_space<vmem>>, vector<16x128xf32>
    %2 = arith.addf %0, %1 : vector<16x128xf32>
    %c0_3 = arith.constant 0 : index
    %c0_4 = arith.constant 0 : index
    %3 = vector.load %arg3[%c0_3, %c0_4] : memref<16x128xf32, #tpu.memory_space<vmem>>, vector<16x128xf32>
    tpu.vector_store %arg3[%c0_3, %c0_4], %2 {strides = array<i32>} : memref<16x128xf32, #tpu.memory_space<vmem>>, vector<16x128xf32>,
    %4 = arith.subf %0, %1 : vector<16x128xf32>
    %c0_5 = arith.constant 0 : index
    %c0_6 = arith.constant 0 : index
    %5 = vector.load %arg4[%c0_5, %c0_6] : memref<16x128xf32, #tpu.memory_space<vmem>>, vector<16x128xf32>
    tpu.vector_store %arg4[%c0_5, %c0_6], %4 {strides = array<i32>} : memref<16x128xf32, #tpu.memory_space<vmem>>, vector<16x128xf32>,
    return
  }
  func.func @transform_0(%arg0: i32) -> (i32, i32) {
    %c0_i32 = arith.constant 0 : i32
    %c0_i32_0 = arith.constant 0 : i32
    return %arg0, %c0_i32 : i32, i32
  }
  func.func @transform_1(%arg0: i32) -> (i32, i32) {
    %c0_i32 = arith.constant 0 : i32
    %c0_i32_0 = arith.constant 0 : i32
    return %arg0, %c0_i32 : i32, i32
  }
  func.func @transform_2(%arg0: i32) -> (i32, i32) {
    %c0_i32 = arith.constant 0 : i32
    %c0_i32_0 = arith.constant 0 : i32
    return %arg0, %c0_i32 : i32, i32
  }
  func.func @transform_3(%arg0: i32) -> (i32, i32) {
    %c0_i32 = arith.constant 0 : i32
    %c0_i32_0 = arith.constant 0 : i32
    return %arg0, %c0_i32 : i32, i32
  }
}

</mosaic_0001>

<llo_original>
// kernel: test_model.1
$region0: #{test_model.1}
  #allocation0 [shape = 'u32[]', space=smem, size = 0x4, offset = 0x4, fixed_abs, tag = 'smem constant byte address 0x4 - core index']
  #allocation1 [shape = 'u32[144,128]{1,0:T(1,128)}', space=vmem, size = 0x12000, scoped, tag = 'internal scratch']
  %s0 = inlined_call_operand.vmem [shape: f32[16,128], index: 0, kind: input, shape index: {}]
  %s1 = inlined_call_operand.vmem [shape: f32[16,128], index: 1, kind: input, shape index: {}]
  %s2 = inlined_call_operand.vmem [shape: f32[16,128], index: 2, kind: output, shape index: {0}]
  %s3 = inlined_call_operand.vmem [shape: f32[16,128], index: 3, kind: output, shape index: {1}]
  %4 = xla_tuple %s2, %s3
  %s5 = sld [smem:[#allocation0]]
  $region26: #{test_model.1} parent=0
    _
  %s7 = ssub.s32 1, %s5
  %s8 = scalar_select 0, %s7, %s5
  // Predicated region
  $region2: #{test_model.1} parent=0 // pred_check
    _
  $region3: #{test_model.1} parent=0 // pred_check_branch
    %10 = sbr.rel (0) target = $region5
  $region4: #{test_model.1} parent=0 // pred_region
    _
  $region5: #{test_model.1} parent=0 // pred_fallthru
    _
  // Predicated region
  $region6: #{test_model.1} parent=0 // pred_check
    _
  $region7: #{test_model.1} parent=0 // pred_check_branch
    %12 = sbr.rel (0) target = $region9
  $region8: #{test_model.1} parent=0 // pred_region
    _
  $region9: #{test_model.1} parent=0 // pred_fallthru
    _
  %v13 = vld [vmem:[%s0] sm:$0xff]
  %v14 = vld [vmem:[%s0 + $0x8] sm:$0xff]
  %v15 = vld [vmem:[%s1] sm:$0xff]
  %v16 = vld [vmem:[%s1 + $0x8] sm:$0xff]
  %v17 = vadd.f32 %v13, %v15
  %v18 = vadd.f32 %v14, %v16
  %19 = vst [vmem:[%s2] sm:$0xff] %v17
  %20 = vst [vmem:[%s2 + $0x8] sm:$0xff] %v18
  %v21 = vsub.f32 %v13, %v15
  %v22 = vsub.f32 %v14, %v16
  %23 = vst [vmem:[%s3] sm:$0xff] %v21
  %24 = vst [vmem:[%s3 + $0x8] sm:$0xff] %v22
  // Predicated region
  $region10: #{test_model.1} parent=0 // pred_check
    _
  $region11: #{test_model.1} parent=0 // pred_check_branch
    %26 = sbr.rel (0) target = $region13
  $region12: #{test_model.1} parent=0 // pred_region
    _
  $region13: #{test_model.1} parent=0 // pred_fallthru
    _
  // Predicated region
  $region14: #{test_model.1} parent=0 // pred_check
    _
  $region15: #{test_model.1} parent=0 // pred_check_branch
    %28 = sbr.rel (0) target = $region17
  $region16: #{test_model.1} parent=0 // pred_region
    _
  $region17: #{test_model.1} parent=0 // pred_fallthru
    _
  // Predicated region
  $region18: #{test_model.1} parent=0 // pred_check
    _
  $region19: #{test_model.1} parent=0 // pred_check_branch
    %30 = sbr.rel (0) target = $region21
  $region20: #{test_model.1} parent=0 // pred_region
    _
  $region21: #{test_model.1} parent=0 // pred_fallthru
    _
  // Predicated region
  $region22: #{test_model.1} parent=0 // pred_check
    _
  $region23: #{test_model.1} parent=0 // pred_check_branch
    %32 = sbr.rel (0) target = $region25
  $region24: #{test_model.1} parent=0 // pred_region
    _
  $region25: #{test_model.1} parent=0 // pred_fallthru
    _

</llo_original>
